<compile_context>
chip_gen: v7x
topology: tpu7x:2x2x1
jax: 0.10.0
libtpu: 0.0.40
codegen_flags: <defaults>
</compile_context>

<pallas_src>
import functools

import jax
import jax.numpy as jnp
from jax.experimental import pallas as pl
from jax.experimental.pallas import tpu as pltpu

_LANE = 128
_SUBLANE = 8


def _round_up(x, m):
    return (x + m - 1) // m * m


def _cdiv(a, b):
    return (a + b - 1) // b


def _vmem_capacity_bytes():
    """Per-core VMEM capacity (generation-aware) with a conservative fallback."""
    try:
        cap = getattr(pltpu.get_tpu_info(), "vmem_capacity_bytes", None)
        if cap:
            return int(cap)
    except Exception:
        pass
    return 64 << 20  # v7x per-TensorCore size; safe lower bound for v5e/v6e.


# --------------------------------------------------------------------------- #
# Kernels
# --------------------------------------------------------------------------- #
def _ffn_resident_kernel(x_ref, w1_ref, b1_ref, w2_ref, b2_ref, o_ref):
    # x_ref:  (tm, Hp)  bf16 token tile (pipelined / double-buffered)
    # w1_ref: (Hp, Hp)  fc1 weight (in, out) bf16, resident single copy in VMEM
    # b1_ref: (1, Hp)   f32
    # w2_ref: (Hp, Hp)  fc2 weight (in, out) bf16, resident single copy in VMEM
    # b2_ref: (1, Hp)   f32
    h = jnp.dot(x_ref[...], w1_ref[...], preferred_element_type=jnp.float32)
    h = jnp.maximum(h + b1_ref[...], 0.0)  # ReLU in f32
    # TODO(synk): dropout is identity at inference (training=False); a training
    # variant would draw a mask with pltpu.prng_seed / pltpu.prng_random_bits.
    y = jnp.dot(h.astype(w2_ref.dtype), w2_ref[...],
                preferred_element_type=jnp.float32) + b2_ref[...]
    o_ref[...] = y.astype(o_ref.dtype)


def _ffn_stream_kernel(x_ref, w1_ref, b1_ref, w2_ref, b2_ref, o_ref, y_acc):
    # Streams W1 in (Hp, tn) column slabs and W2 in (tn, Hp) row slabs over the
    # inner grid axis j; y is accumulated in f32 scratch and written at last j.
    # x_ref:  (tm, Hp) bf16   w1_ref: (Hp, tn)   b1_ref: (1, tn)
    # w2_ref: (tn, Hp)        b2_ref: (1, Hp)    o_ref: (tm, Hp)  y_acc f32
    j = pl.program_id(1)

    @pl.when(j == 0)
    def _():
        y_acc[...] = jnp.zeros_like(y_acc)

    h = jnp.dot(x_ref[...], w1_ref[...], preferred_element_type=jnp.float32)
    h = jnp.maximum(h + b1_ref[...], 0.0)  # ReLU (dropout = identity at eval)
    y_acc[...] += jnp.dot(h.astype(w2_ref.dtype), w2_ref[...],
                          preferred_element_type=jnp.float32)

    @pl.when(j == pl.num_programs(1) - 1)
    def _():
        o_ref[...] = (y_acc[...] + b2_ref[...]).astype(o_ref.dtype)


# --------------------------------------------------------------------------- #
# Parameter prep (call once, outside the per-step jitted path)
# --------------------------------------------------------------------------- #
def prepare_ffn_params(w1, b1, w2, b2, *, param_dtype=jnp.bfloat16):
    """w1/w2: torch-style (out, in) weights; b1/b2: (hidden,).

    Returns (in, out) weights cast to `param_dtype`, zero-padded so hidden is a
    lane-dense multiple of 128, plus (1, Hp) f32 biases.
    """
    hidden = w1.shape[0]
    hp = _round_up(hidden, _LANE)
    pad = hp - hidden

    def _prep_w(w):  # (out, in) -> padded (in, out)
        return jnp.pad(w.T.astype(param_dtype), ((0, pad), (0, pad)))

    def _prep_b(b):
        return jnp.pad(b.astype(jnp.float32), (0, pad)).reshape(1, hp)

    return _prep_w(w1), _prep_b(b1), _prep_w(w2), _prep_b(b2)


# --------------------------------------------------------------------------- #
# Wrapper
# --------------------------------------------------------------------------- #
@functools.partial(jax.jit, static_argnames=("tm", "tn", "force_stream"))
def knowformer_ffn(x, w1t, b1, w2t, b2, *, tm=512, tn=512, force_stream=False):
    """Fused fc1 -> ReLU -> (eval-mode dropout) -> fc2.

    x: (..., hidden).  w1t/b1/w2t/b2: outputs of prepare_ffn_params.
    """
    orig_shape = x.shape
    hidden = orig_shape[-1]
    hp = w1t.shape[0]

    x2d = x.reshape(-1, hidden)
    m = x2d.shape[0]

    # Pre-cast the only pipelined operand: halves its HBM DMA bytes and the
    # double-buffered x-tile VMEM.
    if w1t.dtype != x2d.dtype:
        x2d = x2d.astype(w1t.dtype)
    # Hidden (contraction) axis must be zero-padded to the lane-dense Hp.
    if hp != hidden:
        x2d = jnp.pad(x2d, ((0, 0), (0, hp - hidden)))
    # Token axis is deliberately NOT padded: the last partial block reads past
    # the end (rows are independent) and OOB output writes are dropped.

    # Row tile: fill the MXU, shrink for tiny inputs, and keep >= 2 grid steps
    # when possible so "parallel" can shard across v7x's two TensorCores.
    tm_eff = min(_round_up(tm, _SUBLANE), _round_up(m, _SUBLANE))
    if m > _SUBLANE and _cdiv(m, tm_eff) < 2:
        tm_eff = _round_up(_cdiv(m, 2), _SUBLANE)
    grid_m = _cdiv(m, tm_eff)

    xsize = jnp.dtype(x2d.dtype).itemsize
    osize = jnp.dtype(x.dtype).itemsize
    wsize = jnp.dtype(w1t.dtype).itemsize

    vmem_budget = (_vmem_capacity_bytes() * 7) // 8
    headroom = 4 << 20

    def resident_bytes(tm_):
        w = 2 * hp * hp * wsize + 2 * hp * 4            # single-copy weights + biases
        io = 2 * tm_ * hp * (xsize + osize)             # double-buffered x / out tiles
        return w + io + tm_ * hp * 4                    # + f32 intermediate h

    use_stream = force_stream or (resident_bytes(tm_eff) + headroom > vmem_budget)

    if not use_stream:
        vmem_limit = int(min(vmem_budget,
                             max(32 << 20, resident_bytes(tm_eff) + headroom)))
        flops = 4 * grid_m * tm_eff * hp * hp
        bytes_acc = int(2 * hp * hp * wsize + m * hp * (xsize + osize))

        out = pl.pallas_call(
            _ffn_resident_kernel,
            out_shape=jax.ShapeDtypeStruct((m, hp), x.dtype),
            grid_spec=pltpu.PrefetchScalarGridSpec(
                num_scalar_prefetch=0,
                grid=(grid_m,),
                in_specs=[
                    # x tile: pipelined over the token axis.
                    pl.BlockSpec((tm_eff, hp), lambda i: (i, 0)),
                    # Unblocked VMEM specs: whole array copied into VMEM once,
                    # single buffer (not part of the double-buffered pipeline).
                    pl.BlockSpec(memory_space=pltpu.MemorySpace.VMEM),  # w1^T
                    pl.BlockSpec(memory_space=pltpu.MemorySpace.VMEM),  # b1
                    pl.BlockSpec(memory_space=pltpu.MemorySpace.VMEM),  # w2^T
                    pl.BlockSpec(memory_space=pltpu.MemorySpace.VMEM),  # b2
                ],
                out_specs=pl.BlockSpec((tm_eff, hp), lambda i: (i, 0)),
            ),
            compiler_params=pltpu.CompilerParams(
                dimension_semantics=("parallel",),
                vmem_limit_bytes=vmem_limit,
            ),
            cost_estimate=pl.CostEstimate(
                flops=flops, transcendentals=0, bytes_accessed=bytes_acc),
        )(x2d, w1t, b1, w2t, b2)
    else:
        # Column/row slab width for W1 / W2: multiple of 128 that divides Hp.
        cands = [c for c in range(min(hp, _round_up(tn, _LANE)), 0, -_LANE)
                 if hp % c == 0]
        if not cands:
            cands = [hp]
        idx = 0
        tn_eff = cands[idx]

        def stream_bytes(tm_, tn_):
            w = 2 * 2 * hp * tn_ * wsize                # double-buffered W1/W2 slabs
            io = 2 * tm_ * hp * (xsize + osize)
            return w + io + tm_ * hp * 4 + tm_ * tn_ * 4 + 8 * (tn_ + hp)

        while (stream_bytes(tm_eff, tn_eff) + headroom > vmem_budget
               and idx + 1 < len(cands)):
            idx += 1
            tn_eff = cands[idx]
        while (stream_bytes(tm_eff, tn_eff) + headroom > vmem_budget
               and tm_eff > _SUBLANE):
            tm_eff = max(_SUBLANE, _round_up(tm_eff // 2, _SUBLANE))
        grid_m = _cdiv(m, tm_eff)
        grid_n = hp // tn_eff

        vmem_limit = int(min(vmem_budget,
                             max(32 << 20, stream_bytes(tm_eff, tn_eff) + headroom)))
        flops = 4 * grid_m * tm_eff * hp * hp
        bytes_acc = int(grid_m * 2 * hp * hp * wsize + m * hp * (xsize + osize))

        out = pl.pallas_call(
            _ffn_stream_kernel,
            out_shape=jax.ShapeDtypeStruct((m, hp), x.dtype),
            grid_spec=pltpu.PrefetchScalarGridSpec(
                num_scalar_prefetch=0,
                grid=(grid_m, grid_n),
                in_specs=[
                    pl.BlockSpec((tm_eff, hp), lambda i, j: (i, 0)),   # x tile
                    pl.BlockSpec((hp, tn_eff), lambda i, j: (0, j)),   # W1 col slab
                    pl.BlockSpec((1, tn_eff), lambda i, j: (0, j)),    # b1 slab
                    pl.BlockSpec((tn_eff, hp), lambda i, j: (j, 0)),   # W2 row slab
                    pl.BlockSpec((1, hp), lambda i, j: (0, 0)),        # b2
                ],
                out_specs=pl.BlockSpec((tm_eff, hp), lambda i, j: (i, 0)),
                scratch_shapes=[pltpu.VMEM((tm_eff, hp), jnp.float32)],
            ),
            compiler_params=pltpu.CompilerParams(
                dimension_semantics=("parallel", "arbitrary"),
                vmem_limit_bytes=vmem_limit,
            ),
            cost_estimate=pl.CostEstimate(
                flops=flops, transcendentals=0, bytes_accessed=bytes_acc),
        )(x2d, w1t, b1, w2t, b2)

    return out[:, :hidden].reshape(orig_shape)


# --------------------------------------------------------------------------- #
# Demo / self-test
# --------------------------------------------------------------------------- #
def _init_linear(key, out_dim, in_dim, dtype=jnp.float32):
    # Deterministic init mimicking torch.nn.Linear default: U(-1/sqrt(in), 1/sqrt(in)).
    kw, kb = jax.random.split(key)
    bound = 1.0 / (in_dim ** 0.5)
    w = jax.random.uniform(kw, (out_dim, in_dim), dtype, minval=-bound, maxval=bound)
    b = jax.random.uniform(kb, (out_dim,), dtype, minval=-bound, maxval=bound)
    return w, b


def _run_case(key, batch, seq, hidden, **kw):
    kx, k1, k2 = jax.random.split(key, 3)
    x = jax.random.normal(kx, (batch, seq, hidden), jnp.float32)
    w1, b1 = _init_linear(k1, hidden, hidden)
    w2, b2 = _init_linear(k2, hidden, hidden)

    # One-time param prep (transpose + bf16 cast + lane padding), outside jit.
    w1t, b1p, w2t, b2p = prepare_ffn_params(w1, b1, w2, b2)

    out = jax.block_until_ready(knowformer_ffn(x, w1t, b1p, w2t, b2p, **kw))

    # Pure-JAX f32 reference (bf16 matmul operands => relaxed tolerance).
    ref = jnp.maximum(x @ w1.T + b1, 0.0) @ w2.T + b2
    assert out.shape == x.shape
    rel_err = float(jnp.max(jnp.abs(out - ref)) / (jnp.max(jnp.abs(ref)) + 1e-6))
    assert rel_err < 3e-2, f"mismatch vs reference: rel err {rel_err}"


if __name__ == "__main__":
    key = jax.random.PRNGKey(0)
    k_a, k_b = jax.random.split(key)

    # Module-shaped small case: exercises the resident-weight path.
    _run_case(k_a, 2, 8, 32)
    # Also exercise the K/N-streamed weight path (forced, small sizes).
    _run_case(k_b, 2, 8, 256, tn=128, force_stream=True)

    print("KERNEL_OK")
</pallas_src>

<mosaic_0001>
module attributes {stable_mosaic.version = 11 : i64} {
  func.func @_ffn_resident_kernel(%arg0: i32, %arg1: memref<8x128xbf16, #tpu.memory_space<vmem>>, %arg2: memref<128x128xbf16, #tpu.memory_space<vmem>>, %arg3: memref<1x128xf32, #tpu.memory_space<vmem>>, %arg4: memref<128x128xbf16, #tpu.memory_space<vmem>>, %arg5: memref<1x128xf32, #tpu.memory_space<vmem>>, %arg6: memref<8x128xf32, #tpu.memory_space<vmem>>) attributes {dimension_semantics = [#tpu.dimension_semantics<parallel>], iteration_bounds = array<i64: 2>, scalar_prefetch = 0 : i64, scratch_operands = 0 : i64, tpu.core_type = #tpu.core_type<tc>, window_params = [{transform_indices = @transform_0, window_bounds = array<i64: 8, 128>}, {pipeline_mode = #tpu.pipeline_mode<synchronous>, transform_indices = @transform_1, window_bounds = array<i64: 128, 128>}, {pipeline_mode = #tpu.pipeline_mode<synchronous>, transform_indices = @transform_2, window_bounds = array<i64: 1, 128>}, {pipeline_mode = #tpu.pipeline_mode<synchronous>, transform_indices = @transform_3, window_bounds = array<i64: 128, 128>}, {pipeline_mode = #tpu.pipeline_mode<synchronous>, transform_indices = @transform_4, window_bounds = array<i64: 1, 128>}, {transform_indices = @transform_5, window_bounds = array<i64: 8, 128>}]} {
    %c0 = arith.constant 0 : index
    %c0_0 = arith.constant 0 : index
    %0 = vector.load %arg1[%c0, %c0_0] : memref<8x128xbf16, #tpu.memory_space<vmem>>, vector<8x128xbf16>
    %c0_1 = arith.constant 0 : index
    %c0_2 = arith.constant 0 : index
    %1 = vector.load %arg2[%c0_1, %c0_2] : memref<128x128xbf16, #tpu.memory_space<vmem>>, vector<128x128xbf16>
    %cst = arith.constant dense<0.000000e+00> : vector<8x128xf32>
    %2 = tpu.matmul %0, %1, %cst {dimension_numbers = #tpu.dot_dimension_numbers<[1], [0], [0], [1], [0, 0, 1, 1], [], []>} : vector<8x128xbf16>, vector<128x128xbf16>, vector<8x128xf32> -> vector<8x128xf32>
    %c0_3 = arith.constant 0 : index
    %c0_4 = arith.constant 0 : index
    %3 = vector.load %arg3[%c0_3, %c0_4] : memref<1x128xf32, #tpu.memory_space<vmem>>, vector<1x128xf32>
    %4 = vector.broadcast %3 : vector<1x128xf32> to vector<8x128xf32>
    %5 = arith.addf %2, %4 : vector<8x128xf32>
    %cst_5 = arith.constant 0.000000e+00 : f32
    %6 = vector.broadcast %cst_5 : f32 to vector<8x128xf32>
    %7 = arith.maximumf %5, %6 : vector<8x128xf32>
    %8 = arith.truncf %7 : vector<8x128xf32> to vector<8x128xbf16>
    %c0_6 = arith.constant 0 : index
    %c0_7 = arith.constant 0 : index
    %9 = vector.load %arg4[%c0_6, %c0_7] : memref<128x128xbf16, #tpu.memory_space<vmem>>, vector<128x128xbf16>
    %cst_8 = arith.constant dense<0.000000e+00> : vector<8x128xf32>
    %10 = tpu.matmul %8, %9, %cst_8 {dimension_numbers = #tpu.dot_dimension_numbers<[1], [0], [0], [1], [0, 0, 1, 1], [], []>} : vector<8x128xbf16>, vector<128x128xbf16>, vector<8x128xf32> -> vector<8x128xf32>
    %c0_9 = arith.constant 0 : index
    %c0_10 = arith.constant 0 : index
    %11 = vector.load %arg5[%c0_9, %c0_10] : memref<1x128xf32, #tpu.memory_space<vmem>>, vector<1x128xf32>
    %12 = vector.broadcast %11 : vector<1x128xf32> to vector<8x128xf32>
    %13 = arith.addf %10, %12 : vector<8x128xf32>
    %c0_11 = arith.constant 0 : index
    %c0_12 = arith.constant 0 : index
    %14 = vector.load %arg6[%c0_11, %c0_12] : memref<8x128xf32, #tpu.memory_space<vmem>>, vector<8x128xf32>
    tpu.vector_store %arg6[%c0_11, %c0_12], %13 {strides = array<i32>} : memref<8x128xf32, #tpu.memory_space<vmem>>, vector<8x128xf32>,
    return
  }
  func.func @transform_0(%arg0: i32) -> (i32, i32) {
    %c0_i32 = arith.constant 0 : i32
    %c0_i32_0 = arith.constant 0 : i32
    return %arg0, %c0_i32 : i32, i32
  }
  func.func @transform_1(%arg0: i32) -> (i32, i32) {
    %c0_i32 = arith.constant 0 : i32
    %c0_i32_0 = arith.constant 0 : i32
    %c0_i32_1 = arith.constant 0 : i32
    return %c0_i32, %c0_i32_0 : i32, i32
  }
  func.func @transform_2(%arg0: i32) -> (i32, i32) {
    %c0_i32 = arith.constant 0 : i32
    %c0_i32_0 = arith.constant 0 : i32
    %c0_i32_1 = arith.constant 0 : i32
    return %c0_i32, %c0_i32_0 : i32, i32
  }
  func.func @transform_3(%arg0: i32) -> (i32, i32) {
    %c0_i32 = arith.constant 0 : i32
    %c0_i32_0 = arith.constant 0 : i32
    %c0_i32_1 = arith.constant 0 : i32
    return %c0_i32, %c0_i32_0 : i32, i32
  }
  func.func @transform_4(%arg0: i32) -> (i32, i32) {
    %c0_i32 = arith.constant 0 : i32
    %c0_i32_0 = arith.constant 0 : i32
    %c0_i32_1 = arith.constant 0 : i32
    return %c0_i32, %c0_i32_0 : i32, i32
  }
  func.func @transform_5(%arg0: i32) -> (i32, i32) {
    %c0_i32 = arith.constant 0 : i32
    %c0_i32_0 = arith.constant 0 : i32
    return %arg0, %c0_i32 : i32, i32
  }
}

</mosaic_0001>

<llo_original>
// kernel: knowformer_ffn.1
$region0: #{knowformer_ffn.1}
  #allocation0 [shape = 'u32[]', space=smem, size = 0x4, offset = 0x4, fixed_abs, tag = 'smem constant byte address 0x4 - core index']
  #allocation1 [shape = 'u32[144,128]{1,0:T(1,128)}', space=vmem, size = 0x12000, scoped, tag = 'internal scratch']
  %s0 = inlined_call_operand.vmem [shape: bf16[16,128], index: 0, kind: input, shape index: {}]
  %s1 = inlined_call_operand.hbm [shape: bf16[128,128], index: 1, kind: input, shape index: {}]
  %s2 = inlined_call_operand.vmem [shape: f32[1,128], index: 2, kind: input, shape index: {}]
  %s3 = inlined_call_operand.hbm [shape: bf16[128,128], index: 3, kind: input, shape index: {}]
  %s4 = inlined_call_operand.vmem [shape: f32[1,128], index: 4, kind: input, shape index: {}]
  %s5 = inlined_call_operand.vmem [shape: f32[16,128], index: 5, kind: output, shape index: {}]
  %s6 = sld [smem:[#allocation0]]
  $region61: #{knowformer_ffn.1} parent=0
    _
  %s8 = ssub.s32 1, %s6
  %s9 = scalar_select 0, %s8, %s6
  $region1: #{knowformer_ffn.1} parent=0
    #allocation2 [shape = 'u8[32768]{0}', space=vmem, size = 0x8000, scoped, tag = 'input window, operand 1, single buffered']
    #allocation3 [shape = 's32[2]{0}', space=sflag, size = 0x8, scoped, tag = 'scoped memory for knowformer_ffn.1']
    #allocation4 [shape = 'u8[32768]{0}', space=vmem, size = 0x8000, scoped, tag = 'input window, operand 3, single buffered']
    #allocation5 [shape = 's32[1]{0}', space=sflag, size = 0x4, scoped, tag = 'scoped memory for knowformer_ffn.1']
    %10 = vsyncpa [#allocation3], 0
    %11 = vsyncpa [#allocation5], 0
    loop: start=0, step=1, limit=4
    $region2: #{knowformer_ffn.1} parent=1 // loop_pre_header
      _
    $region3: #{knowformer_ffn.1} parent=1 // loop_header
      %s13 = sphi 0, %s17
      %p14 = scmp.ge.s32.totalorder %s13, 4
      %s23 = sphi 0, %s25
      %s26 = sphi 0, %s23
      %s27 = sphi 0, %s26
      %s43 = sphi 0, %s27
      %s47 = sphi 0, %s47
      %s49 = sphi 0, %s47
      %s50 = sphi 0, %s49
      %s64 = sphi 0, %s50
      %s68 = sphi 0, %s68
      %s70 = sphi 0, %s68
      %s71 = sphi 0, %s70
      %s85 = sphi 0, %s71
      %s89 = sphi 0, %s89
      %s91 = sphi 0, %s89
      %s92 = sphi 0, %s91
      %s106 = sphi 0, %s92
      %s110 = sphi 0, %s110
      %s112 = sphi 0, %s110
      %s113 = sphi 0, %s112
      %s127 = sphi 0, %s113
      %s133 = sphi 0, %s135
      %s136 = sphi 0, %s133
      %s137 = sphi 0, %s136
      %s153 = sphi 0, %s137
    $region4: #{knowformer_ffn.1} parent=1 // loop_header_branch
      %16 = sbr.rel (%p14) target = $region8
    $region5: #{knowformer_ffn.1} parent=1 // loop_body
      %s18 = ssub.s32 %s13, 1
      %s19 = ssub.s32 %s13, 2
      %s20 = sadd.s32 %s13, 1
      %s21 = ssub.s32 %s13, %s20
      %p22 = scmp.eq.s32.totalorder %s21, 0
      %s24 = sadd.s32 %s23, 1
      %s25 = scalar_select %p22, %s23, %s24
      %p28 = pneg %p22
      %p29 = scmp.eq.s32.totalorder %s13, 1
      %p30 = por %p28, %p29
      %p31 = scmp.ne.s32.totalorder %s23, %s26
      %p32 = scmp.eq.s32.totalorder %s13, 0
      %p33 = por %p31, %p32
      %p34 = scmp.ne.s32.totalorder %s23, %s26
      %p35 = scmp.eq.s32.totalorder %s18, 1
      %p36 = por %p34, %p35
      %p37 = scmp.ne.s32.totalorder %s26, %s27
      %p38 = scmp.eq.s32.totalorder %s18, 0
      %p39 = por %p37, %p38
      %p40 = scmp.ne.s32.totalorder %s26, %s27
      %p41 = scmp.eq.s32.totalorder %s19, 1
      %p42 = por %p40, %p41
      %p44 = scmp.ne.s32.totalorder %s27, %s43
      %p45 = scmp.eq.s32.totalorder %s19, 0
      %p46 = por %p44, %p45
      %s48 = sadd.s32 %s47, 1
      %p51 = scmp.eq.s32.totalorder %s13, 1
      %p52 = scmp.ne.s32.totalorder %s47, %s49
      %p53 = scmp.eq.s32.totalorder %s13, 0
      %p54 = por %p52, %p53
      %p55 = scmp.ne.s32.totalorder %s47, %s49
      %p56 = scmp.eq.s32.totalorder %s18, 1
      %p57 = por %p55, %p56
      %p58 = scmp.ne.s32.totalorder %s49, %s50
      %p59 = scmp.eq.s32.totalorder %s18, 0
      %p60 = por %p58, %p59
      %p61 = scmp.ne.s32.totalorder %s49, %s50
      %p62 = scmp.eq.s32.totalorder %s19, 1
      %p63 = por %p61, %p62
      %p65 = scmp.ne.s32.totalorder %s50, %s64
      %p66 = scmp.eq.s32.totalorder %s19, 0
      %p67 = por %p65, %p66
      %s69 = sadd.s32 %s68, 1
      %p72 = scmp.eq.s32.totalorder %s13, 1
      %p73 = scmp.ne.s32.totalorder %s68, %s70
      %p74 = scmp.eq.s32.totalorder %s13, 0
      %p75 = por %p73, %p74
      %p76 = scmp.ne.s32.totalorder %s68, %s70
      %p77 = scmp.eq.s32.totalorder %s18, 1
      %p78 = por %p76, %p77
      %p79 = scmp.ne.s32.totalorder %s70, %s71
      %p80 = scmp.eq.s32.totalorder %s18, 0
      %p81 = por %p79, %p80
      %p82 = scmp.ne.s32.totalorder %s70, %s71
      %p83 = scmp.eq.s32.totalorder %s19, 1
      %p84 = por %p82, %p83
      %p86 = scmp.ne.s32.totalorder %s71, %s85
      %p87 = scmp.eq.s32.totalorder %s19, 0
      %p88 = por %p86, %p87
      %s90 = sadd.s32 %s89, 1
      %p93 = scmp.eq.s32.totalorder %s13, 1
      %p94 = scmp.ne.s32.totalorder %s89, %s91
      %p95 = scmp.eq.s32.totalorder %s13, 0
      %p96 = por %p94, %p95
      %p97 = scmp.ne.s32.totalorder %s89, %s91
      %p98 = scmp.eq.s32.totalorder %s18, 1
      %p99 = por %p97, %p98
      %p100 = scmp.ne.s32.totalorder %s91, %s92
      %p101 = scmp.eq.s32.totalorder %s18, 0
      %p102 = por %p100, %p101
      %p103 = scmp.ne.s32.totalorder %s91, %s92
      %p104 = scmp.eq.s32.totalorder %s19, 1
      %p105 = por %p103, %p104
      %p107 = scmp.ne.s32.totalorder %s92, %s106
      %p108 = scmp.eq.s32.totalorder %s19, 0
      %p109 = por %p107, %p108
      %s111 = sadd.s32 %s110, 1
      %p114 = scmp.eq.s32.totalorder %s13, 1
      %p115 = scmp.ne.s32.totalorder %s110, %s112
      %p116 = scmp.eq.s32.totalorder %s13, 0
      %p117 = por %p115, %p116
      %p118 = scmp.ne.s32.totalorder %s110, %s112
      %p119 = scmp.eq.s32.totalorder %s18, 1
      %p120 = por %p118, %p119
      %p121 = scmp.ne.s32.totalorder %s112, %s113
      %p122 = scmp.eq.s32.totalorder %s18, 0
      %p123 = por %p121, %p122
      %p124 = scmp.ne.s32.totalorder %s112, %s113
      %p125 = scmp.eq.s32.totalorder %s19, 1
      %p126 = por %p124, %p125
      %p128 = scmp.ne.s32.totalorder %s113, %s127
      %p129 = scmp.eq.s32.totalorder %s19, 0
      %p130 = por %p128, %p129
      %s131 = ssub.s32 %s13, %s20
      %p132 = scmp.eq.s32.totalorder %s131, 0
      %s134 = sadd.s32 %s133, 1
      %s135 = scalar_select %p132, %s133, %s134
      %p138 = pneg %p132
      %p139 = scmp.eq.s32.totalorder %s13, 1
      %p140 = por %p138, %p139
      %p141 = scmp.ne.s32.totalorder %s133, %s136
      %p142 = scmp.eq.s32.totalorder %s13, 0
      %p143 = por %p141, %p142
      %p144 = scmp.ne.s32.totalorder %s133, %s136
      %p145 = scmp.eq.s32.totalorder %s18, 1
      %p146 = por %p144, %p145
      %p147 = scmp.ne.s32.totalorder %s136, %s137
      %p148 = scmp.eq.s32.totalorder %s18, 0
      %p149 = por %p147, %p148
      %p150 = scmp.ne.s32.totalorder %s136, %s137
      %p151 = scmp.eq.s32.totalorder %s19, 1
      %p152 = por %p150, %p151
      %p154 = scmp.ne.s32.totalorder %s137, %s153
      %p155 = scmp.eq.s32.totalorder %s19, 0
      %p156 = por %p154, %p155
      %p157 = scmp.le.s32.totalorder 1, %s13
      %p158 = scmp.lt.s32.totalorder %s13, 3
      %p159 = pnand %p157, %p158
      %p160 = pneg %p159
      // Predicated region
      $region9: #{knowformer_ffn.1} parent=5 // pred_check
        _
      $region10: #{knowformer_ffn.1} parent=5 // pred_check_branch
        %162 = sbr.rel (%p159) target = $region12
      $region11: #{knowformer_ffn.1} parent=5 // pred_region
        %s163 = ssub.s32 %s13, 1
        // Predicated region
        $region13: #{knowformer_ffn.1} parent=11 // pred_check
          %p164 = pneg %p60
        $region14: #{knowformer_ffn.1} parent=11 // pred_check_branch
          %166 = sbr.rel (%p164) target = $region16
        $region15: #{knowformer_ffn.1} parent=11 // pred_region
          %s168 = ssub.s32 1024, 1024
          %169 = vsyncadd [#allocation3], %s168
          %s170 = sshll.u32 [#allocation2], 4
          %s171 = int_to_ptr.vmem [resolvable:$true] %s170
          %176 = dma.hbm_to_vmem [thread:$0]  %s1, 1024, %s171, [#allocation3], 64, 64, 4
        $region16: #{knowformer_ffn.1} parent=11 // pred_fallthru
          _
        // Predicated region
        $region17: #{knowformer_ffn.1} parent=11 // pred_check
          %p177 = pneg %p81
        $region18: #{knowformer_ffn.1} parent=11 // pred_check_branch
          %179 = sbr.rel (%p177) target = $region20
        $region19: #{knowformer_ffn.1} parent=11 // pred_region
          _
        $region20: #{knowformer_ffn.1} parent=11 // pred_fallthru
          _
        // Predicated region
        $region21: #{knowformer_ffn.1} parent=11 // pred_check
          %p180 = pneg %p102
        $region22: #{knowformer_ffn.1} parent=11 // pred_check_branch
          %182 = sbr.rel (%p180) target = $region24
        $region23: #{knowformer_ffn.1} parent=11 // pred_region
          %s184 = ssub.s32 1024, 1024
          %185 = vsyncadd [#allocation5], %s184
          %s186 = sshll.u32 [#allocation4], 4
          %s187 = int_to_ptr.vmem [resolvable:$true] %s186
          %192 = dma.hbm_to_vmem [thread:$0]  %s3, 1024, %s187, [#allocation5], 64, 64, 4
        $region24: #{knowformer_ffn.1} parent=11 // pred_fallthru
          _
        // Predicated region
        $region25: #{knowformer_ffn.1} parent=11 // pred_check
          %p193 = pneg %p123
        $region26: #{knowformer_ffn.1} parent=11 // pred_check_branch
          %195 = sbr.rel (%p193) target = $region28
        $region27: #{knowformer_ffn.1} parent=11 // pred_region
          _
        $region28: #{knowformer_ffn.1} parent=11 // pred_fallthru
          _
      $region12: #{knowformer_ffn.1} parent=5 // pred_fallthru
        _
      %p196 = scmp.lt.s32.totalorder %s13, 2
      // Predicated region
      $region29: #{knowformer_ffn.1} parent=5 // pred_check
        %p197 = pneg %p196
      $region30: #{knowformer_ffn.1} parent=5 // pred_check_branch
        %199 = sbr.rel (%p197) target = $region32
      $region31: #{knowformer_ffn.1} parent=5 // pred_region
        // Predicated region
        $region33: #{knowformer_ffn.1} parent=31 // pred_check
          %p200 = pneg %p33
        $region34: #{knowformer_ffn.1} parent=31 // pred_check_branch
          %202 = sbr.rel (%p200) target = $region36
        $region35: #{knowformer_ffn.1} parent=31 // pred_region
          %p203 = scmp.lt.s32.totalorder %s13, 1
          %s204 = scalar_select %p203, %s13, 1
          %s205 = smul.addr %s204, 4
          %s206 = scalar_lea.vmem %s0, %s205
        $region36: #{knowformer_ffn.1} parent=31 // pred_fallthru
          _
      $region32: #{knowformer_ffn.1} parent=5 // pred_fallthru
        _
      %p207 = scmp.le.s32.totalorder 1, %s13
      %p208 = scmp.lt.s32.totalorder %s13, 3
      %p209 = pnand %p207, %p208
      %p210 = pneg %p209
      // Predicated region
      $region37: #{knowformer_ffn.1} parent=5 // pred_check
        _
      $region38: #{knowformer_ffn.1} parent=5 // pred_check_branch
        %212 = sbr.rel (%p209) target = $region40
      $region39: #{knowformer_ffn.1} parent=5 // pred_region
        %s213 = ssub.s32 %s13, 1
        // Predicated region
        $region41: #{knowformer_ffn.1} parent=39 // pred_check
          %p214 = pneg %p60
        $region42: #{knowformer_ffn.1} parent=39 // pred_check_branch
          %216 = sbr.rel (%p214) target = $region44
        $region43: #{knowformer_ffn.1} parent=39 // pred_region
          %217 = dma.done [#allocation3], 1024
        $region44: #{knowformer_ffn.1} parent=39 // pred_fallthru
          _
        // Predicated region
        $region45: #{knowformer_ffn.1} parent=39 // pred_check
          %p218 = pneg %p102
        $region46: #{knowformer_ffn.1} parent=39 // pred_check_branch
          %220 = sbr.rel (%p218) target = $region48
        $region47: #{knowformer_ffn.1} parent=39 // pred_region
          %221 = dma.done [#allocation5], 1024
        $region48: #{knowformer_ffn.1} parent=39 // pred_fallthru
          _
        %p222 = scmp.lt.s32.totalorder %s18, 1
        %s223 = scalar_select %p222, %s18, 1
        %s224 = smul.addr %s223, 4
        %s225 = scalar_lea.vmem %s0, %s224
        %p226 = pneg %p39
        %p227 = pneg %p36
        %p228 = pneg %p60
        %p229 = pneg %p57
        %p230 = pneg %p81
        %p231 = pneg %p78
        %p232 = pneg %p102
        %p233 = pneg %p99
        %p234 = pneg %p123
        %p235 = pneg %p120
        %p236 = pneg %p149
        %p237 = pneg %p146
        %p238 = scmp.lt.s32.totalorder %s18, 1
        %s239 = scalar_select %p238, %s18, 1
        %s240 = smul.addr %s239, 8
        %s241 = scalar_lea.vmem %s5, %s240
        %p242 = scmp.lt.s32.totalorder %s18, 1
        %s243 = scalar_select %p242, %s18, 1
        %s244 = smul.addr %s243, 4
        %s245 = scalar_lea.vmem %s0, %s244
        %p246 = scmp.lt.s32.totalorder %s18, 1
        %s247 = scalar_select %p246, %s18, 1
        %s248 = smul.addr %s247, 8
        %s249 = scalar_lea.vmem %s5, %s248
        %v251 = vld [vmem:[%s245] sm:$0xf]
        %v252 = vld [vmem:[#allocation2] sm:$0xf]
        %v253 = vld [vmem:[#allocation2 + $0x4] sm:$0xf]
        %v254 = vld [vmem:[#allocation2 + $0x8] sm:$0xf]
        %v255 = vld [vmem:[#allocation2 + $0xc] sm:$0xf]
        %v256 = vld [vmem:[#allocation2 + $0x10] sm:$0xf]
        %v257 = vld [vmem:[#allocation2 + $0x14] sm:$0xf]
        %v258 = vld [vmem:[#allocation2 + $0x18] sm:$0xf]
        %v259 = vld [vmem:[#allocation2 + $0x1c] sm:$0xf]
        %v260 = vld [vmem:[#allocation2 + $0x20] sm:$0xf]
        %v261 = vld [vmem:[#allocation2 + $0x24] sm:$0xf]
        %v262 = vld [vmem:[#allocation2 + $0x28] sm:$0xf]
        %v263 = vld [vmem:[#allocation2 + $0x2c] sm:$0xf]
        %v264 = vld [vmem:[#allocation2 + $0x30] sm:$0xf]
        %v265 = vld [vmem:[#allocation2 + $0x34] sm:$0xf]
        %v266 = vld [vmem:[#allocation2 + $0x38] sm:$0xf]
        %v267 = vld [vmem:[#allocation2 + $0x3c] sm:$0xf]
        %v268 = vld [vmem:[%s2] sm:$0x1]
        %v270 = vlaneseq
        %v271 = vshrl.u32 %v270, 7
        %v272 = vsub.s32 0, %v271
        %v273 = vrot.slane %v268, %v272
        %v291 = vunpack.c.l.b16 %v252
        %v292 = vunpack.c.l.b16 %v253
        %v293 = vunpack.c.l.b16 %v254
        %v294 = vunpack.c.l.b16 %v255
        %v295 = vunpack.c.l.b16 %v256
        %v296 = vunpack.c.l.b16 %v257
        %v297 = vunpack.c.l.b16 %v258
        %v298 = vunpack.c.l.b16 %v259
        %v299 = vunpack.c.l.b16 %v260
        %v300 = vunpack.c.l.b16 %v261
        %v301 = vunpack.c.l.b16 %v262
        %v302 = vunpack.c.l.b16 %v263
        %v303 = vunpack.c.l.b16 %v264
        %v304 = vunpack.c.l.b16 %v265
        %v305 = vunpack.c.l.b16 %v266
        %v306 = vunpack.c.l.b16 %v267
        %v307 = vpack.c.b16 %v292, %v291
        %v308 = vpack.c.b16 %v294, %v293
        %v309 = vpack.c.b16 %v296, %v295
        %v310 = vpack.c.b16 %v298, %v297
        %v311 = vpack.c.b16 %v300, %v299
        %v312 = vpack.c.b16 %v302, %v301
        %v313 = vpack.c.b16 %v304, %v303
        %v314 = vpack.c.b16 %v306, %v305
        %323 = vmatprep.subr.bf16.mxu0 0
        %324 = vmatpush1.bf16.msra.mxu0 %v307
        %325 = vmatprep.subr.bf16.mxu0 0
        %326 = vmatpush1.bf16.msra.mxu0 %v308
        %327 = vmatprep.subr.bf16.mxu0 0
        %328 = vmatpush1.bf16.msra.mxu0 %v309
        %329 = vmatprep.subr.bf16.mxu0 0
        %330 = vmatpush1.bf16.msra.mxu0 %v310
        %331 = vmatprep.subr.bf16.mxu0 0
        %332 = vmatpush1.bf16.msra.mxu0 %v311
        %333 = vmatprep.subr.bf16.mxu0 0
        %334 = vmatpush1.bf16.msra.mxu0 %v312
        %335 = vmatprep.subr.bf16.mxu0 0
        %336 = vmatpush1.bf16.msra.mxu0 %v313
        %337 = vmatprep.subr.bf16.mxu0 0
        %338 = vmatpush1.bf16.msra.mxu0 %v314
        %339 = vmatprep.subr.bf16.mxu0 0
        %340 = vmatpush1.bf16.msra.mxu0 0
        %341 = vmatprep.subr.bf16.mxu0 0
        %342 = vmatpush1.bf16.msra.mxu0 0
        %343 = vmatprep.subr.bf16.mxu0 0
        %344 = vmatpush1.bf16.msra.mxu0 0
        %345 = vmatprep.subr.bf16.mxu0 0
        %346 = vmatpush1.bf16.msra.mxu0 0
        %347 = vmatprep.subr.bf16.mxu0 0
        %348 = vmatpush1.bf16.msra.mxu0 0
        %349 = vmatprep.subr.bf16.mxu0 0
        %350 = vmatpush1.bf16.msra.mxu0 0
        %351 = vmatprep.subr.bf16.mxu0 0
        %352 = vmatpush1.bf16.msra.mxu0 0
        %353 = vmatprep.subr.bf16.mxu0 0
        %354 = vmatpush1.bf16.msra.mxu0 0
        %355 = vmatprep.mubr.bf16.mxu0 0
        %356 = vmatmul.mubr.bf16.gmra.mrb[0].mxu0 %v251
        %v357 = vpop.f32.mrb[0].mxu0
        %v358 = vadd.f32 %v273, %v357
        %v359 = vpop.f32.mrb[0].mxu0
        %v360 = vpop.f32.mrb[0].mxu0
        %v361 = vpop.f32.mrb[0].mxu0
        %362 = vdwg.mxu0
        %v363 = vmax.f32 %v358, 0.0
        %v364 = vpack.c.bf16 %v363, %v363
        %v365 = vld [vmem:[#allocation4] sm:$0xf]
        %v366 = vld [vmem:[#allocation4 + $0x4] sm:$0xf]
        %v367 = vld [vmem:[#allocation4 + $0x8] sm:$0xf]
        %v368 = vld [vmem:[#allocation4 + $0xc] sm:$0xf]
        %v369 = vld [vmem:[#allocation4 + $0x10] sm:$0xf]
        %v370 = vld [vmem:[#allocation4 + $0x14] sm:$0xf]
        %v371 = vld [vmem:[#allocation4 + $0x18] sm:$0xf]
        %v372 = vld [vmem:[#allocation4 + $0x1c] sm:$0xf]
        %v373 = vld [vmem:[#allocation4 + $0x20] sm:$0xf]
        %v374 = vld [vmem:[#allocation4 + $0x24] sm:$0xf]
        %v375 = vld [vmem:[#allocation4 + $0x28] sm:$0xf]
        %v376 = vld [vmem:[#allocation4 + $0x2c] sm:$0xf]
        %v377 = vld [vmem:[#allocation4 + $0x30] sm:$0xf]
        %v378 = vld [vmem:[#allocation4 + $0x34] sm:$0xf]
        %v379 = vld [vmem:[#allocation4 + $0x38] sm:$0xf]
        %v380 = vld [vmem:[#allocation4 + $0x3c] sm:$0xf]
        %v381 = vld [vmem:[%s4] sm:$0x1]
        %v383 = vlaneseq
        %v384 = vshrl.u32 %v383, 7
        %v385 = vsub.s32 0, %v384
        %v386 = vrot.slane %v381, %v385
        %v404 = vunpack.c.l.b16 %v365
        %v405 = vunpack.c.l.b16 %v366
        %v406 = vunpack.c.l.b16 %v367
        %v407 = vunpack.c.l.b16 %v368
        %v408 = vunpack.c.l.b16 %v369
        %v409 = vunpack.c.l.b16 %v370
        %v410 = vunpack.c.l.b16 %v371
        %v411 = vunpack.c.l.b16 %v372
        %v412 = vunpack.c.l.b16 %v373
        %v413 = vunpack.c.l.b16 %v374
        %v414 = vunpack.c.l.b16 %v375
        %v415 = vunpack.c.l.b16 %v376
        %v416 = vunpack.c.l.b16 %v377
        %v417 = vunpack.c.l.b16 %v378
        %v418 = vunpack.c.l.b16 %v379
        %v419 = vunpack.c.l.b16 %v380
        %v420 = vpack.c.b16 %v405, %v404
        %v421 = vpack.c.b16 %v407, %v406
        %v422 = vpack.c.b16 %v409, %v408
        %v423 = vpack.c.b16 %v411, %v410
        %v424 = vpack.c.b16 %v413, %v412
        %v425 = vpack.c.b16 %v415, %v414
        %v426 = vpack.c.b16 %v417, %v416
        %v427 = vpack.c.b16 %v419, %v418
        %436 = vmatprep.subr.bf16.mxu0 0
        %437 = vmatpush1.bf16.msra.mxu0 %v420
        %438 = vmatprep.subr.bf16.mxu0 0
        %439 = vmatpush1.bf16.msra.mxu0 %v421
        %440 = vmatprep.subr.bf16.mxu0 0
        %441 = vmatpush1.bf16.msra.mxu0 %v422
        %442 = vmatprep.subr.bf16.mxu0 0
        %443 = vmatpush1.bf16.msra.mxu0 %v423
        %444 = vmatprep.subr.bf16.mxu0 0
        %445 = vmatpush1.bf16.msra.mxu0 %v424
        %446 = vmatprep.subr.bf16.mxu0 0
        %447 = vmatpush1.bf16.msra.mxu0 %v425
        %448 = vmatprep.subr.bf16.mxu0 0
        %449 = vmatpush1.bf16.msra.mxu0 %v426
        %450 = vmatprep.subr.bf16.mxu0 0
        %451 = vmatpush1.bf16.msra.mxu0 %v427
        %452 = vmatprep.subr.bf16.mxu0 0
        %453 = vmatpush1.bf16.msra.mxu0 0
        %454 = vmatprep.subr.bf16.mxu0 0
        %455 = vmatpush1.bf16.msra.mxu0 0
        %456 = vmatprep.subr.bf16.mxu0 0
        %457 = vmatpush1.bf16.msra.mxu0 0
        %458 = vmatprep.subr.bf16.mxu0 0
        %459 = vmatpush1.bf16.msra.mxu0 0
        %460 = vmatprep.subr.bf16.mxu0 0
        %461 = vmatpush1.bf16.msra.mxu0 0
        %462 = vmatprep.subr.bf16.mxu0 0
        %463 = vmatpush1.bf16.msra.mxu0 0
        %464 = vmatprep.subr.bf16.mxu0 0
        %465 = vmatpush1.bf16.msra.mxu0 0
        %466 = vmatprep.subr.bf16.mxu0 0
        %467 = vmatpush1.bf16.msra.mxu0 0
        %468 = vmatprep.mubr.bf16.mxu0 0
        %469 = vmatmul.mubr.bf16.gmra.mrb[0].mxu0 %v364
        %v470 = vpop.f32.mrb[0].mxu0
        %v471 = vadd.f32 %v386, %v470
        %v472 = vpop.f32.mrb[0].mxu0
        %v473 = vpop.f32.mrb[0].mxu0
        %v474 = vpop.f32.mrb[0].mxu0
        %475 = vdwg.mxu0
        %476 = vst [vmem:[%s249] sm:$0xff] %v471
        %p477 = scmp.lt.s32.totalorder %s18, 1
        %s478 = scalar_select %p477, %s18, 1
        %s479 = smul.addr %s478, 8
        %s480 = scalar_lea.vmem %s5, %s479
        // Predicated region
        $region49: #{knowformer_ffn.1} parent=39 // pred_check
          %p481 = pneg %p146
        $region50: #{knowformer_ffn.1} parent=39 // pred_check_branch
          %483 = sbr.rel (%p481) target = $region52
        $region51: #{knowformer_ffn.1} parent=39 // pred_region
          _
        $region52: #{knowformer_ffn.1} parent=39 // pred_fallthru
          _
      $region40: #{knowformer_ffn.1} parent=5 // pred_fallthru
        _
      %p484 = scmp.le.s32.totalorder 2, %s13
      // Predicated region
      $region53: #{knowformer_ffn.1} parent=5 // pred_check
        %p485 = pneg %p484
      $region54: #{knowformer_ffn.1} parent=5 // pred_check_branch
        %487 = sbr.rel (%p485) target = $region56
      $region55: #{knowformer_ffn.1} parent=5 // pred_region
        %s488 = ssub.s32 %s13, 2
        // Predicated region
        $region57: #{knowformer_ffn.1} parent=55 // pred_check
          %p489 = pneg %p152
        $region58: #{knowformer_ffn.1} parent=55 // pred_check_branch
          %491 = sbr.rel (%p489) target = $region60
        $region59: #{knowformer_ffn.1} parent=55 // pred_region
          %p492 = scmp.lt.s32.totalorder %s19, 1
          %s493 = scalar_select %p492, %s19, 1
          %s494 = smul.addr %s493, 8
          %s495 = scalar_lea.vmem %s5, %s494
        $region60: #{knowformer_ffn.1} parent=55 // pred_fallthru
          _
      $region56: #{knowformer_ffn.1} parent=5 // pred_fallthru
        _
    $region6: #{knowformer_ffn.1} parent=1 // loop_footer
      %s17 = sadd.s32 1, %s13
    $region7: #{knowformer_ffn.1} parent=1 // loop_footer_branch
      %12 = sbr.rel target = $region3
    $region8: #{knowformer_ffn.1} parent=1 // loop_exit
      _
    %496 = vsyncpa [#allocation3], 1
    %s497 = scalar_lea.sflag [#allocation3], 1
    %498 = vsyncpa %s497, 1
    %499 = vsyncpa [#allocation5], 1

</llo_original>
